<compile_context>
chip_gen: v7x
topology: tpu7x:2x2x1
jax: 0.10.0
libtpu: 0.0.40
codegen_flags: <defaults>
</compile_context>

<pallas_src>
import jax
import jax.numpy as jnp
from jax.experimental import pallas as pl
from jax.experimental.pallas import tpu as pltpu


# ----------------------------- helpers ---------------------------------------

_SQRT_HALF = 0.7071067811865476


def _erf_approx(x):
    """Abramowitz & Stegun 7.1.26 erf approximation, |err| <= 1.5e-7.

    Uses only ops with guaranteed Mosaic lowerings (exp, mul, add, where).
    """
    a1, a2, a3, a4, a5 = (0.254829592, -0.284496736, 1.421413741,
                          -1.453152027, 1.061405429)
    p = 0.3275911
    sign = jnp.where(x >= 0.0, 1.0, -1.0)
    ax = jnp.abs(x)
    t = 1.0 / (1.0 + p * ax)
    poly = ((((a5 * t + a4) * t + a3) * t + a2) * t + a1) * t
    y = 1.0 - poly * jnp.exp(-ax * ax)
    return sign * y


def _gelu_exact(x):
    """Exact (erf-based) GELU, matching PyTorch F.gelu default."""
    return 0.5 * x * (1.0 + _erf_approx(x * _SQRT_HALF))


def _pick_tile(dim, cap, align):
    """Largest tile <= cap that divides `dim` and is a multiple of `align`;
    falls back to the full dim (full-extent blocks are always legal)."""
    if dim <= cap:
        return dim
    t = (cap // align) * align
    while t >= align:
        if dim % t == 0:
            return t
        t -= align
    return dim


# ----------------------------- Pallas kernels --------------------------------

def _geglu_proj_kernel(x_ref, wa_ref, wb_ref, ba_ref, bb_ref, o_ref,
                       acc_a, acc_b):
    """out = (x@Wa + ba) * gelu(x@Wb + bb), accumulated over the K grid axis."""
    k = pl.program_id(2)

    @pl.when(k == 0)
    def _():
        acc_a[...] = jnp.zeros_like(acc_a)
        acc_b[...] = jnp.zeros_like(acc_b)

    x = x_ref[...]
    acc_a[...] += jnp.dot(x, wa_ref[...], preferred_element_type=jnp.float32)
    acc_b[...] += jnp.dot(x, wb_ref[...], preferred_element_type=jnp.float32)

    @pl.when(k == pl.num_programs(2) - 1)
    def _():
        a = acc_a[...] + ba_ref[...].astype(jnp.float32)
        g = acc_b[...] + bb_ref[...].astype(jnp.float32)
        o_ref[...] = (a * _gelu_exact(g)).astype(o_ref.dtype)


def _linear_bias_kernel(x_ref, w_ref, b_ref, o_ref, acc):
    """out = x@W + b, accumulated over the K grid axis."""
    k = pl.program_id(2)

    @pl.when(k == 0)
    def _():
        acc[...] = jnp.zeros_like(acc)

    acc[...] += jnp.dot(x_ref[...], w_ref[...],
                        preferred_element_type=jnp.float32)

    @pl.when(k == pl.num_programs(2) - 1)
    def _():
        o_ref[...] = (acc[...] + b_ref[...].astype(jnp.float32)).astype(o_ref.dtype)


# ----------------------------- kernel wrappers --------------------------------

_TM_CAP, _TN_CAP, _TK_CAP = 256, 256, 512   # f32-safe; ~3-4 MiB VMEM w/ 2x buffering


def pallas_geglu_proj(x, wa, wb, ba, bb):
    """x: (M, K); wa/wb: (K, H); ba/bb: (1, H) -> (M, H) = (x@wa+ba)*gelu(x@wb+bb)."""
    M, K = x.shape
    _, H = wa.shape
    tm = _pick_tile(M, _TM_CAP, 8)
    tn = _pick_tile(H, _TN_CAP, 128)
    tk = _pick_tile(K, _TK_CAP, 128)
    grid = (M // tm, H // tn, K // tk)
    dsize = x.dtype.itemsize
    cost = pl.CostEstimate(
        flops=2 * 2 * M * H * K + 8 * M * H,
        transcendentals=M * H,
        bytes_accessed=(M * K + 2 * K * H + 2 * H + M * H) * dsize,
    )
    return pl.pallas_call(
        _geglu_proj_kernel,
        out_shape=jax.ShapeDtypeStruct((M, H), x.dtype),
        grid=grid,
        in_specs=[
            pl.BlockSpec((tm, tk), lambda i, j, k: (i, k)),
            pl.BlockSpec((tk, tn), lambda i, j, k: (k, j)),
            pl.BlockSpec((tk, tn), lambda i, j, k: (k, j)),
            pl.BlockSpec((1, tn), lambda i, j, k: (0, j)),
            pl.BlockSpec((1, tn), lambda i, j, k: (0, j)),
        ],
        out_specs=pl.BlockSpec((tm, tn), lambda i, j, k: (i, j)),
        scratch_shapes=[pltpu.VMEM((tm, tn), jnp.float32),
                        pltpu.VMEM((tm, tn), jnp.float32)],
        compiler_params=pltpu.CompilerParams(
            dimension_semantics=("parallel", "parallel", "arbitrary")),
        cost_estimate=cost,
    )(x, wa, wb, ba, bb)


def pallas_linear_bias(x, w, b):
    """x: (M, K); w: (K, N); b: (1, N) -> (M, N) = x@w + b."""
    M, K = x.shape
    _, N = w.shape
    tm = _pick_tile(M, _TM_CAP, 8)
    tn = _pick_tile(N, _TN_CAP, 128)
    tk = _pick_tile(K, _TK_CAP, 128)
    grid = (M // tm, N // tn, K // tk)
    dsize = x.dtype.itemsize
    cost = pl.CostEstimate(
        flops=2 * M * N * K + M * N,
        transcendentals=0,
        bytes_accessed=(M * K + K * N + N + M * N) * dsize,
    )
    return pl.pallas_call(
        _linear_bias_kernel,
        out_shape=jax.ShapeDtypeStruct((M, N), x.dtype),
        grid=grid,
        in_specs=[
            pl.BlockSpec((tm, tk), lambda i, j, k: (i, k)),
            pl.BlockSpec((tk, tn), lambda i, j, k: (k, j)),
            pl.BlockSpec((1, tn), lambda i, j, k: (0, j)),
        ],
        out_specs=pl.BlockSpec((tm, tn), lambda i, j, k: (i, j)),
        scratch_shapes=[pltpu.VMEM((tm, tn), jnp.float32)],
        compiler_params=pltpu.CompilerParams(
            dimension_semantics=("parallel", "parallel", "arbitrary")),
        cost_estimate=cost,
    )(x, w, b)


# ----------------------------- module forward --------------------------------

def feedforward_forward(params, x):
    """FeedForward(dim, mult=4, activation='geglu') forward.  x: (B, N, dim)."""
    B, N, D = x.shape
    x2 = x.reshape(B * N, D)
    h = pallas_geglu_proj(x2, params["wa"], params["wb"],
                          params["ba"], params["bb"])         # (B*N, H), GEGLU'd
    y = pallas_linear_bias(h, params["wo"], params["bo"])     # (B*N, D)
    return y.reshape(B, N, D)


# pure-JAX reference for correctness check (exact erf gelu, like F.gelu)
def feedforward_reference(params, x):
    a = x @ params["wa"] + params["ba"][0]
    g = x @ params["wb"] + params["bb"][0]
    h = a * jax.nn.gelu(g, approximate=False)
    return h @ params["wo"] + params["bo"][0]


# ----------------------------- parameter init --------------------------------

def init_params(key, dim, mult=4):
    """Mirrors PyTorch nn.Linear default init.  First linear's (dim, 2H) weight
    is stored as two column-halves (value / gate) so the GEGLU split is free."""
    hidden = int(dim * mult)
    k1, k2, k3, k4, k5, k6 = jax.random.split(key, 6)

    def uinit(k, fan_in, shape):
        bound = 1.0 / jnp.sqrt(fan_in)
        return jax.random.uniform(k, shape, jnp.float32, -bound, bound)

    return {
        "wa": uinit(k1, dim, (dim, hidden)),       # net[0] weight, cols [:H]
        "wb": uinit(k2, dim, (dim, hidden)),       # net[0] weight, cols [H:]
        "ba": uinit(k3, dim, (1, hidden)),         # net[0] bias   [:H]
        "bb": uinit(k4, dim, (1, hidden)),         # net[0] bias   [H:]
        "wo": uinit(k5, hidden, (hidden, dim)),    # net[3] weight
        "bo": uinit(k6, hidden, (1, dim)),         # net[3] bias
    }


# ----------------------------------- main ------------------------------------

if __name__ == "__main__":
    B, N, dim, mult = 2, 8, 32, 4          # hidden = 128 (lane-dense)

    key = jax.random.PRNGKey(0)
    kp, kx = jax.random.split(key)
    params = init_params(kp, dim, mult)
    x = jax.random.normal(kx, (B, N, dim), jnp.float32)

    y = feedforward_forward(params, x)
    y = jax.block_until_ready(y)

    y_ref = feedforward_reference(params, x)

    assert y.shape == (B, N, dim)
    assert jnp.allclose(y, y_ref, rtol=1e-4, atol=1e-4), "output mismatch"

    print("KERNEL_OK")
</pallas_src>

<mosaic_0001>
module attributes {stable_mosaic.version = 11 : i64} {
  func.func @_geglu_proj_kernel(%arg0: i32, %arg1: i32, %arg2: i32, %arg3: memref<16x32xf32, #tpu.memory_space<vmem>>, %arg4: memref<32x128xf32, #tpu.memory_space<vmem>>, %arg5: memref<32x128xf32, #tpu.memory_space<vmem>>, %arg6: memref<1x128xf32, #tpu.memory_space<vmem>>, %arg7: memref<1x128xf32, #tpu.memory_space<vmem>>, %arg8: memref<16x128xf32, #tpu.memory_space<vmem>>, %arg9: memref<16x128xf32, #tpu.memory_space<vmem>>, %arg10: memref<16x128xf32, #tpu.memory_space<vmem>>) attributes {dimension_semantics = [#tpu.dimension_semantics<parallel>, #tpu.dimension_semantics<parallel>, #tpu.dimension_semantics<arbitrary>], iteration_bounds = array<i64: 1, 1, 1>, scalar_prefetch = 0 : i64, scratch_operands = 2 : i64, tpu.core_type = #tpu.core_type<tc>, window_params = [{transform_indices = @transform_0, window_bounds = array<i64: 16, 32>}, {transform_indices = @transform_1, window_bounds = array<i64: 32, 128>}, {transform_indices = @transform_2, window_bounds = array<i64: 32, 128>}, {transform_indices = @transform_3, window_bounds = array<i64: 1, 128>}, {transform_indices = @transform_4, window_bounds = array<i64: 1, 128>}, {transform_indices = @transform_5, window_bounds = array<i64: 16, 128>}]} {
    %c0_i32 = arith.constant 0 : i32
    %0 = arith.cmpi eq, %arg2, %c0_i32 : i32
    %1 = arith.extui %0 : i1 to i32
    %c0_i32_0 = arith.constant 0 : i32
    %2 = arith.cmpi ne, %1, %c0_i32_0 : i32
    scf.if %2 {
      %cst_17 = arith.constant 0.000000e+00 : f32
      %17 = vector.broadcast %cst_17 : f32 to vector<16x128xf32>
      %c0_18 = arith.constant 0 : index
      %c0_19 = arith.constant 0 : index
      %18 = vector.load %arg9[%c0_18, %c0_19] : memref<16x128xf32, #tpu.memory_space<vmem>>, vector<16x128xf32>
      tpu.vector_store %arg9[%c0_18, %c0_19], %17 {strides = array<i32>} : memref<16x128xf32, #tpu.memory_space<vmem>>, vector<16x128xf32>,
      %cst_20 = arith.constant 0.000000e+00 : f32
      %19 = vector.broadcast %cst_20 : f32 to vector<16x128xf32>
      %c0_21 = arith.constant 0 : index
      %c0_22 = arith.constant 0 : index
      %20 = vector.load %arg10[%c0_21, %c0_22] : memref<16x128xf32, #tpu.memory_space<vmem>>, vector<16x128xf32>
      tpu.vector_store %arg10[%c0_21, %c0_22], %19 {strides = array<i32>} : memref<16x128xf32, #tpu.memory_space<vmem>>, vector<16x128xf32>,
    } else {
    }
    %c0 = arith.constant 0 : index
    %c0_1 = arith.constant 0 : index
    %3 = vector.load %arg3[%c0, %c0_1] : memref<16x32xf32, #tpu.memory_space<vmem>>, vector<16x32xf32>
    %c0_2 = arith.constant 0 : index
    %c0_3 = arith.constant 0 : index
    %4 = vector.load %arg9[%c0_2, %c0_3] : memref<16x128xf32, #tpu.memory_space<vmem>>, vector<16x128xf32>
    %c0_4 = arith.constant 0 : index
    %c0_5 = arith.constant 0 : index
    %5 = vector.load %arg4[%c0_4, %c0_5] : memref<32x128xf32, #tpu.memory_space<vmem>>, vector<32x128xf32>
    %cst = arith.constant dense<0.000000e+00> : vector<16x128xf32>
    %6 = tpu.matmul %3, %5, %cst {dimension_numbers = #tpu.dot_dimension_numbers<[1], [0], [0], [1], [0, 0, 1, 1], [], []>} : vector<16x32xf32>, vector<32x128xf32>, vector<16x128xf32> -> vector<16x128xf32>
    %7 = arith.addf %4, %6 : vector<16x128xf32>
    %c0_6 = arith.constant 0 : index
    %c0_7 = arith.constant 0 : index
    %8 = vector.load %arg9[%c0_6, %c0_7] : memref<16x128xf32, #tpu.memory_space<vmem>>, vector<16x128xf32>
    tpu.vector_store %arg9[%c0_6, %c0_7], %7 {strides = array<i32>} : memref<16x128xf32, #tpu.memory_space<vmem>>, vector<16x128xf32>,
    %c0_8 = arith.constant 0 : index
    %c0_9 = arith.constant 0 : index
    %9 = vector.load %arg10[%c0_8, %c0_9] : memref<16x128xf32, #tpu.memory_space<vmem>>, vector<16x128xf32>
    %c0_10 = arith.constant 0 : index
    %c0_11 = arith.constant 0 : index
    %10 = vector.load %arg5[%c0_10, %c0_11] : memref<32x128xf32, #tpu.memory_space<vmem>>, vector<32x128xf32>
    %cst_12 = arith.constant dense<0.000000e+00> : vector<16x128xf32>
    %11 = tpu.matmul %3, %10, %cst_12 {dimension_numbers = #tpu.dot_dimension_numbers<[1], [0], [0], [1], [0, 0, 1, 1], [], []>} : vector<16x32xf32>, vector<32x128xf32>, vector<16x128xf32> -> vector<16x128xf32>
    %12 = arith.addf %9, %11 : vector<16x128xf32>
    %c0_13 = arith.constant 0 : index
    %c0_14 = arith.constant 0 : index
    %13 = vector.load %arg10[%c0_13, %c0_14] : memref<16x128xf32, #tpu.memory_space<vmem>>, vector<16x128xf32>
    tpu.vector_store %arg10[%c0_13, %c0_14], %12 {strides = array<i32>} : memref<16x128xf32, #tpu.memory_space<vmem>>, vector<16x128xf32>,
    %c0_i32_15 = arith.constant 0 : i32
    %14 = arith.cmpi eq, %arg2, %c0_i32_15 : i32
    %15 = arith.extui %14 : i1 to i32
    %c0_i32_16 = arith.constant 0 : i32
    %16 = arith.cmpi ne, %15, %c0_i32_16 : i32
    scf.if %16 {
      %c0_17 = arith.constant 0 : index
      %c0_18 = arith.constant 0 : index
      %17 = vector.load %arg9[%c0_17, %c0_18] : memref<16x128xf32, #tpu.memory_space<vmem>>, vector<16x128xf32>
      %c0_19 = arith.constant 0 : index
      %c0_20 = arith.constant 0 : index
      %18 = vector.load %arg6[%c0_19, %c0_20] : memref<1x128xf32, #tpu.memory_space<vmem>>, vector<1x128xf32>
      %19 = vector.broadcast %18 : vector<1x128xf32> to vector<16x128xf32>
      %20 = arith.addf %17, %19 : vector<16x128xf32>
      %c0_21 = arith.constant 0 : index
      %c0_22 = arith.constant 0 : index
      %21 = vector.load %arg10[%c0_21, %c0_22] : memref<16x128xf32, #tpu.memory_space<vmem>>, vector<16x128xf32>
      %c0_23 = arith.constant 0 : index
      %c0_24 = arith.constant 0 : index
      %22 = vector.load %arg7[%c0_23, %c0_24] : memref<1x128xf32, #tpu.memory_space<vmem>>, vector<1x128xf32>
      %23 = vector.broadcast %22 : vector<1x128xf32> to vector<16x128xf32>
      %24 = arith.addf %21, %23 : vector<16x128xf32>
      %cst_25 = arith.constant 5.000000e-01 : f32
      %25 = vector.broadcast %cst_25 : f32 to vector<16x128xf32>
      %26 = arith.mulf %25, %24 : vector<16x128xf32>
      %cst_26 = arith.constant 0.707106769 : f32
      %27 = vector.broadcast %cst_26 : f32 to vector<16x128xf32>
      %28 = arith.mulf %24, %27 : vector<16x128xf32>
      %cst_27 = arith.constant 0.000000e+00 : f32
      %29 = vector.broadcast %cst_27 : f32 to vector<16x128xf32>
      %30 = arith.cmpf oge, %28, %29 : vector<16x128xf32>
      %cst_28 = arith.constant 1.000000e+00 : f32
      %cst_29 = arith.constant -1.000000e+00 : f32
      %31 = vector.broadcast %cst_28 : f32 to vector<16x128xf32>
      %32 = vector.broadcast %cst_29 : f32 to vector<16x128xf32>
      %33 = arith.select %30, %31, %32 : vector<16x128xi1>, vector<16x128xf32>
      %34 = math.absf %28 : vector<16x128xf32>
      %cst_30 = arith.constant 0.327591091 : f32
      %35 = vector.broadcast %cst_30 : f32 to vector<16x128xf32>
      %36 = arith.mulf %35, %34 : vector<16x128xf32>
      %cst_31 = arith.constant 1.000000e+00 : f32
      %37 = vector.broadcast %cst_31 : f32 to vector<16x128xf32>
      %38 = arith.addf %37, %36 : vector<16x128xf32>
      %cst_32 = arith.constant 1.000000e+00 : f32
      %39 = vector.broadcast %cst_32 : f32 to vector<16x128xf32>
      %40 = arith.divf %39, %38 : vector<16x128xf32>
      %cst_33 = arith.constant 1.06140542 : f32
      %41 = vector.broadcast %cst_33 : f32 to vector<16x128xf32>
      %42 = arith.mulf %41, %40 : vector<16x128xf32>
      %cst_34 = arith.constant -1.45315206 : f32
      %43 = vector.broadcast %cst_34 : f32 to vector<16x128xf32>
      %44 = arith.addf %42, %43 : vector<16x128xf32>
      %45 = arith.mulf %44, %40 : vector<16x128xf32>
      %cst_35 = arith.constant 1.42141378 : f32
      %46 = vector.broadcast %cst_35 : f32 to vector<16x128xf32>
      %47 = arith.addf %45, %46 : vector<16x128xf32>
      %48 = arith.mulf %47, %40 : vector<16x128xf32>
      %cst_36 = arith.constant -0.284496725 : f32
      %49 = vector.broadcast %cst_36 : f32 to vector<16x128xf32>
      %50 = arith.addf %48, %49 : vector<16x128xf32>
      %51 = arith.mulf %50, %40 : vector<16x128xf32>
      %cst_37 = arith.constant 0.254829586 : f32
      %52 = vector.broadcast %cst_37 : f32 to vector<16x128xf32>
      %53 = arith.addf %51, %52 : vector<16x128xf32>
      %54 = arith.mulf %53, %40 : vector<16x128xf32>
      %cst_38 = arith.constant 0.000000e+00 : f32
      %55 = vector.broadcast %cst_38 : f32 to vector<16x128xf32>
      %56 = arith.subf %55, %34 : vector<16x128xf32>
      %57 = arith.mulf %56, %34 : vector<16x128xf32>
      %58 = math.exp %57 : vector<16x128xf32>
      %59 = arith.mulf %54, %58 : vector<16x128xf32>
      %cst_39 = arith.constant 1.000000e+00 : f32
      %60 = vector.broadcast %cst_39 : f32 to vector<16x128xf32>
      %61 = arith.subf %60, %59 : vector<16x128xf32>
      %62 = arith.mulf %33, %61 : vector<16x128xf32>
      %cst_40 = arith.constant 1.000000e+00 : f32
      %63 = vector.broadcast %cst_40 : f32 to vector<16x128xf32>
      %64 = arith.addf %63, %62 : vector<16x128xf32>
      %65 = arith.mulf %26, %64 : vector<16x128xf32>
      %66 = arith.mulf %20, %65 : vector<16x128xf32>
      %c0_41 = arith.constant 0 : index
      %c0_42 = arith.constant 0 : index
      %67 = vector.load %arg8[%c0_41, %c0_42] : memref<16x128xf32, #tpu.memory_space<vmem>>, vector<16x128xf32>
      tpu.vector_store %arg8[%c0_41, %c0_42], %66 {strides = array<i32>} : memref<16x128xf32, #tpu.memory_space<vmem>>, vector<16x128xf32>,
    } else {
    }
    return
  }
  func.func @transform_0(%arg0: i32, %arg1: i32, %arg2: i32) -> (i32, i32) {
    %c0_i32 = arith.constant 0 : i32
    return %arg0, %arg2 : i32, i32
  }
  func.func @transform_1(%arg0: i32, %arg1: i32, %arg2: i32) -> (i32, i32) {
    %c0_i32 = arith.constant 0 : i32
    return %arg2, %arg1 : i32, i32
  }
  func.func @transform_2(%arg0: i32, %arg1: i32, %arg2: i32) -> (i32, i32) {
    %c0_i32 = arith.constant 0 : i32
    return %arg2, %arg1 : i32, i32
  }
  func.func @transform_3(%arg0: i32, %arg1: i32, %arg2: i32) -> (i32, i32) {
    %c0_i32 = arith.constant 0 : i32
    %c0_i32_0 = arith.constant 0 : i32
    return %c0_i32, %arg1 : i32, i32
  }
  func.func @transform_4(%arg0: i32, %arg1: i32, %arg2: i32) -> (i32, i32) {
    %c0_i32 = arith.constant 0 : i32
    %c0_i32_0 = arith.constant 0 : i32
    return %c0_i32, %arg1 : i32, i32
  }
  func.func @transform_5(%arg0: i32, %arg1: i32, %arg2: i32) -> (i32, i32) {
    %c0_i32 = arith.constant 0 : i32
    return %arg0, %arg1 : i32, i32
  }
}

</mosaic_0001>

<llo_original>
// kernel: tpu_custom_call.1
$region0: #{tpu_custom_call.1}
  #allocation0 [shape = 'u32[]', space=smem, size = 0x4, offset = 0x4, fixed_abs, tag = 'smem constant byte address 0x4 - core index']
  #allocation1 [shape = 'u32[144,128]{1,0:T(1,128)}', space=vmem, size = 0x12000, scoped, tag = 'internal scratch']
  #allocation2 [shape = 'f32[16,128]{1,0:T(8,128)}', space=vmem, size = 0x2000, scoped, tag = 'scratch operand']
  #allocation3 [shape = 'f32[16,128]{1,0:T(8,128)}', space=vmem, size = 0x2000, scoped, tag = 'scratch operand']
  %s0 = inlined_call_operand.hbm [shape: f32[16,32], index: 0, kind: input, shape index: {}]
  %s1 = inlined_call_operand.hbm [shape: f32[32,128], index: 1, kind: input, shape index: {}]
  %s2 = inlined_call_operand.hbm [shape: f32[32,128], index: 2, kind: input, shape index: {}]
  %s3 = inlined_call_operand.vmem [shape: f32[1,128], index: 3, kind: input, shape index: {}]
  %s4 = inlined_call_operand.vmem [shape: f32[1,128], index: 4, kind: input, shape index: {}]
  %s5 = inlined_call_operand.hbm [shape: f32[16,128], index: 5, kind: output, shape index: {}]
  %s6 = sld [smem:[#allocation0]]
  $region50: #{tpu_custom_call.1} parent=0
    _
  %s8 = ssub.s32 1, %s6
  %s9 = scalar_select 0, %s8, %s6
  $region1: #{tpu_custom_call.1} parent=0
    #allocation4 [shape = 'u8[8192]{0}', space=vmem, size = 0x2000, scoped, tag = 'input window, operand 0, single buffered']
    #allocation5 [shape = 's32[1]{0}', space=sflag, size = 0x4, scoped, tag = 'scoped memory for tpu_custom_call.1']
    #allocation6 [shape = 's32[1]{0}', space=sflag, size = 0x4, scoped, tag = 'scoped memory for tpu_custom_call.1']
    #allocation7 [shape = 'u8[16384]{0}', space=vmem, size = 0x4000, scoped, tag = 'input window, operand 1, single buffered']
    #allocation8 [shape = 's32[1]{0}', space=sflag, size = 0x4, scoped, tag = 'scoped memory for tpu_custom_call.1']
    #allocation9 [shape = 'u8[16384]{0}', space=vmem, size = 0x4000, scoped, tag = 'input window, operand 2, single buffered']
    #allocation10 [shape = 'u8[8192]{0}', space=vmem, size = 0x2000, scoped, tag = 'output window, operand 0, single buffered']
    %10 = vsyncpa [#allocation5], 0
    %11 = vsyncpa [#allocation8], 0
    %12 = vsyncpa [#allocation6], 0
    // Predicated region
    $region2: #{tpu_custom_call.1} parent=1 // pred_check
      _
    $region3: #{tpu_custom_call.1} parent=1 // pred_check_branch
      %14 = sbr.rel (0) target = $region5
    $region4: #{tpu_custom_call.1} parent=1 // pred_region
      %s16 = ssub.s32 256, 256
      %17 = vsyncadd [#allocation5], %s16
      %s18 = sshll.u32 [#allocation4], 4
      %s19 = int_to_ptr.vmem [resolvable:$true] %s18
      %24 = dma.hbm_to_vmem [thread:$0]  %s0, 256, %s19, [#allocation5], 128, 128, 8
    $region5: #{tpu_custom_call.1} parent=1 // pred_fallthru
      _
    // Predicated region
    $region6: #{tpu_custom_call.1} parent=1 // pred_check
      _
    $region7: #{tpu_custom_call.1} parent=1 // pred_check_branch
      %26 = sbr.rel (0) target = $region9
    $region8: #{tpu_custom_call.1} parent=1 // pred_region
      %s28 = ssub.s32 512, 512
      %29 = vsyncadd [#allocation8], %s28
      %s30 = sshll.u32 [#allocation7], 4
      %s31 = int_to_ptr.vmem [resolvable:$true] %s30
      %36 = dma.hbm_to_vmem [thread:$0]  %s1, 512, %s31, [#allocation8], 128, 128, 8
    $region9: #{tpu_custom_call.1} parent=1 // pred_fallthru
      _
    // Predicated region
    $region10: #{tpu_custom_call.1} parent=1 // pred_check
      _
    $region11: #{tpu_custom_call.1} parent=1 // pred_check_branch
      %38 = sbr.rel (0) target = $region13
    $region12: #{tpu_custom_call.1} parent=1 // pred_region
      %s40 = ssub.s32 512, 512
      %41 = vsyncadd [#allocation8], %s40
      %s42 = sshll.u32 [#allocation9], 4
      %s43 = int_to_ptr.vmem [resolvable:$true] %s42
      %48 = dma.hbm_to_vmem [thread:$0]  %s2, 512, %s43, [#allocation8], 128, 128, 8
    $region13: #{tpu_custom_call.1} parent=1 // pred_fallthru
      _
    // Predicated region
    $region14: #{tpu_custom_call.1} parent=1 // pred_check
      _
    $region15: #{tpu_custom_call.1} parent=1 // pred_check_branch
      %50 = sbr.rel (0) target = $region17
    $region16: #{tpu_custom_call.1} parent=1 // pred_region
      _
    $region17: #{tpu_custom_call.1} parent=1 // pred_fallthru
      _
    // Predicated region
    $region18: #{tpu_custom_call.1} parent=1 // pred_check
      _
    $region19: #{tpu_custom_call.1} parent=1 // pred_check_branch
      %52 = sbr.rel (0) target = $region21
    $region20: #{tpu_custom_call.1} parent=1 // pred_region
      _
    $region21: #{tpu_custom_call.1} parent=1 // pred_fallthru
      _
    // Predicated region
    $region22: #{tpu_custom_call.1} parent=1 // pred_check
      _
    $region23: #{tpu_custom_call.1} parent=1 // pred_check_branch
      %54 = sbr.rel (0) target = $region25
    $region24: #{tpu_custom_call.1} parent=1 // pred_region
      %55 = dma.done [#allocation5], 256
    $region25: #{tpu_custom_call.1} parent=1 // pred_fallthru
      _
    // Predicated region
    $region26: #{tpu_custom_call.1} parent=1 // pred_check
      _
    $region27: #{tpu_custom_call.1} parent=1 // pred_check_branch
      %57 = sbr.rel (0) target = $region29
    $region28: #{tpu_custom_call.1} parent=1 // pred_region
      %58 = dma.done [#allocation8], 512
    $region29: #{tpu_custom_call.1} parent=1 // pred_fallthru
      _
    // Predicated region
    $region30: #{tpu_custom_call.1} parent=1 // pred_check
      _
    $region31: #{tpu_custom_call.1} parent=1 // pred_check_branch
      %60 = sbr.rel (0) target = $region33
    $region32: #{tpu_custom_call.1} parent=1 // pred_region
      %61 = dma.done [#allocation8], 512
    $region33: #{tpu_custom_call.1} parent=1 // pred_fallthru
      _
    %p62 = scmp.eq.s32.totalorder 0, 0
    // Predicated region
    $region34: #{tpu_custom_call.1} parent=1 // pred_check
      %p63 = pneg %p62
    $region35: #{tpu_custom_call.1} parent=1 // pred_check_branch
      %65 = sbr.rel (%p63) target = $region37
    $region36: #{tpu_custom_call.1} parent=1 // pred_region
      %66 = vst [vmem:[#allocation2] sm:$0xff] 0.0
      %67 = vst [vmem:[#allocation2 + $0x8] sm:$0xff] 0.0
      %68 = vst [vmem:[#allocation3] sm:$0xff] 0.0
      %69 = vst [vmem:[#allocation3 + $0x8] sm:$0xff] 0.0
    $region37: #{tpu_custom_call.1} parent=1 // pred_fallthru
      _
    %v70 = vld [vmem:[#allocation4] sm:$0xff]
    %v71 = vld [vmem:[#allocation4 + $0x8] sm:$0xff]
    %v72 = vld [vmem:[#allocation2] sm:$0xff]
    %v73 = vld [vmem:[#allocation2 + $0x8] sm:$0xff]
    %v74 = vld [vmem:[#allocation7] sm:$0xff]
    %v75 = vld [vmem:[#allocation7 + $0x8] sm:$0xff]
    %v76 = vld [vmem:[#allocation7 + $0x10] sm:$0xff]
    %v77 = vld [vmem:[#allocation7 + $0x18] sm:$0xff]
    %vm78 = vcmask 261120
    %v80 = vsel %vm78, %v70, 0
    %v83 = vsel %vm78, %v71, 0
    %85 = vmatprep.subr.mxu0 0.0
    %86 = vmatpush1.msra.mxu0 %v74
    %87 = vmatprep.subr.mxu0 0.0
    %88 = vmatpush1.msra.mxu0 %v75
    %89 = vmatprep.subr.mxu0 0.0
    %90 = vmatpush1.msra.mxu0 %v76
    %91 = vmatprep.subr.mxu0 0.0
    %92 = vmatpush1.msra.mxu0 %v77
    %93 = vmatprep.subr.mxu0 0.0
    %94 = vmatpush1.msra.mxu0 0.0
    %95 = vmatprep.subr.mxu0 0.0
    %96 = vmatpush1.msra.mxu0 0.0
    %97 = vmatprep.subr.mxu0 0.0
    %98 = vmatpush1.msra.mxu0 0.0
    %99 = vmatprep.subr.mxu0 0.0
    %100 = vmatpush1.msra.mxu0 0.0
    %101 = vmatprep.subr.mxu0 0.0
    %102 = vmatpush1.msra.mxu0 0.0
    %103 = vmatprep.subr.mxu0 0.0
    %104 = vmatpush1.msra.mxu0 0.0
    %105 = vmatprep.subr.mxu0 0.0
    %106 = vmatpush1.msra.mxu0 0.0
    %107 = vmatprep.subr.mxu0 0.0
    %108 = vmatpush1.msra.mxu0 0.0
    %109 = vmatprep.subr.mxu0 0.0
    %110 = vmatpush1.msra.mxu0 0.0
    %111 = vmatprep.subr.mxu0 0.0
    %112 = vmatpush1.msra.mxu0 0.0
    %113 = vmatprep.subr.mxu0 0.0
    %114 = vmatpush1.msra.mxu0 0.0
    %115 = vmatprep.subr.mxu0 0.0
    %116 = vmatpush1.msra.mxu0 0.0
    %117 = vmatprep.subr.mxu0 0.0
    %118 = vmatpush1.msra.mxu0 0.0
    %119 = vmatprep.subr.mxu0 0.0
    %120 = vmatpush1.msra.mxu0 0.0
    %121 = vmatprep.subr.mxu0 0.0
    %122 = vmatpush1.msra.mxu0 0.0
    %123 = vmatprep.subr.mxu0 0.0
    %124 = vmatpush1.msra.mxu0 0.0
    %125 = vmatprep.subr.mxu0 0.0
    %126 = vmatpush1.msra.mxu0 0.0
    %127 = vmatprep.subr.mxu0 0.0
    %128 = vmatpush1.msra.mxu0 0.0
    %129 = vmatprep.subr.mxu0 0.0
    %130 = vmatpush1.msra.mxu0 0.0
    %131 = vmatprep.subr.mxu0 0.0
    %132 = vmatpush1.msra.mxu0 0.0
    %133 = vmatprep.subr.mxu0 0.0
    %134 = vmatpush1.msra.mxu0 0.0
    %135 = vmatprep.subr.mxu0 0.0
    %136 = vmatpush1.msra.mxu0 0.0
    %137 = vmatprep.subr.mxu0 0.0
    %138 = vmatpush1.msra.mxu0 0.0
    %139 = vmatprep.subr.mxu0 0.0
    %140 = vmatpush1.msra.mxu0 0.0
    %141 = vmatprep.subr.mxu0 0.0
    %142 = vmatpush1.msra.mxu0 0.0
    %143 = vmatprep.subr.mxu0 0.0
    %144 = vmatpush1.msra.mxu0 0.0
    %145 = vmatprep.subr.mxu0 0.0
    %146 = vmatpush1.msra.mxu0 0.0
    %147 = vmatprep.subr.mxu0 0.0
    %148 = vmatpush1.msra.mxu0 0.0
    %149 = vmatprep.mubr.f32.mxu0 0.0
    %150 = vmatmul.mubr.f32.gmra.mrb[0].mxu0 %v80
    %v151 = vpop.f32.mrb[0].mxu0
    %v152 = vadd.f32 0.0, %v151
    %v153 = vpop.f32.mrb[0].mxu0
    %154 = vmatprep.mubr.f32.mxu0 0.0
    %155 = vmatmul.mubr.f32.gmra.mrb[0].mxu0 %v83
    %v156 = vpop.f32.mrb[0].mxu0
    %v157 = vadd.f32 0.0, %v156
    %v158 = vpop.f32.mrb[0].mxu0
    %159 = vdwg.mxu0
    %v160 = vadd.f32 %v72, %v152
    %v161 = vadd.f32 %v73, %v157
    %162 = vst [vmem:[#allocation2] sm:$0xff] %v160
    %163 = vst [vmem:[#allocation2 + $0x8] sm:$0xff] %v161
    %v164 = vld [vmem:[#allocation3] sm:$0xff]
    %v165 = vld [vmem:[#allocation3 + $0x8] sm:$0xff]
    %v166 = vld [vmem:[#allocation9] sm:$0xff]
    %v167 = vld [vmem:[#allocation9 + $0x8] sm:$0xff]
    %v168 = vld [vmem:[#allocation9 + $0x10] sm:$0xff]
    %v169 = vld [vmem:[#allocation9 + $0x18] sm:$0xff]
    %170 = vmatprep.subr.mxu0 0.0
    %171 = vmatpush1.msra.mxu0 %v166
    %172 = vmatprep.subr.mxu0 0.0
    %173 = vmatpush1.msra.mxu0 %v167
    %174 = vmatprep.subr.mxu0 0.0
    %175 = vmatpush1.msra.mxu0 %v168
    %176 = vmatprep.subr.mxu0 0.0
    %177 = vmatpush1.msra.mxu0 %v169
    %178 = vmatprep.subr.mxu0 0.0
    %179 = vmatpush1.msra.mxu0 0.0
    %180 = vmatprep.subr.mxu0 0.0
    %181 = vmatpush1.msra.mxu0 0.0
    %182 = vmatprep.subr.mxu0 0.0
    %183 = vmatpush1.msra.mxu0 0.0
    %184 = vmatprep.subr.mxu0 0.0
    %185 = vmatpush1.msra.mxu0 0.0
    %186 = vmatprep.subr.mxu0 0.0
    %187 = vmatpush1.msra.mxu0 0.0
    %188 = vmatprep.subr.mxu0 0.0
    %189 = vmatpush1.msra.mxu0 0.0
    %190 = vmatprep.subr.mxu0 0.0
    %191 = vmatpush1.msra.mxu0 0.0
    %192 = vmatprep.subr.mxu0 0.0
    %193 = vmatpush1.msra.mxu0 0.0
    %194 = vmatprep.subr.mxu0 0.0
    %195 = vmatpush1.msra.mxu0 0.0
    %196 = vmatprep.subr.mxu0 0.0
    %197 = vmatpush1.msra.mxu0 0.0
    %198 = vmatprep.subr.mxu0 0.0
    %199 = vmatpush1.msra.mxu0 0.0
    %200 = vmatprep.subr.mxu0 0.0
    %201 = vmatpush1.msra.mxu0 0.0
    %202 = vmatprep.subr.mxu0 0.0
    %203 = vmatpush1.msra.mxu0 0.0
    %204 = vmatprep.subr.mxu0 0.0
    %205 = vmatpush1.msra.mxu0 0.0
    %206 = vmatprep.subr.mxu0 0.0
    %207 = vmatpush1.msra.mxu0 0.0
    %208 = vmatprep.subr.mxu0 0.0
    %209 = vmatpush1.msra.mxu0 0.0
    %210 = vmatprep.subr.mxu0 0.0
    %211 = vmatpush1.msra.mxu0 0.0
    %212 = vmatprep.subr.mxu0 0.0
    %213 = vmatpush1.msra.mxu0 0.0
    %214 = vmatprep.subr.mxu0 0.0
    %215 = vmatpush1.msra.mxu0 0.0
    %216 = vmatprep.subr.mxu0 0.0
    %217 = vmatpush1.msra.mxu0 0.0
    %218 = vmatprep.subr.mxu0 0.0
    %219 = vmatpush1.msra.mxu0 0.0
    %220 = vmatprep.subr.mxu0 0.0
    %221 = vmatpush1.msra.mxu0 0.0
    %222 = vmatprep.subr.mxu0 0.0
    %223 = vmatpush1.msra.mxu0 0.0
    %224 = vmatprep.subr.mxu0 0.0
    %225 = vmatpush1.msra.mxu0 0.0
    %226 = vmatprep.subr.mxu0 0.0
    %227 = vmatpush1.msra.mxu0 0.0
    %228 = vmatprep.subr.mxu0 0.0
    %229 = vmatpush1.msra.mxu0 0.0
    %230 = vmatprep.subr.mxu0 0.0
    %231 = vmatpush1.msra.mxu0 0.0
    %232 = vmatprep.subr.mxu0 0.0
    %233 = vmatpush1.msra.mxu0 0.0
    %234 = vmatprep.mubr.f32.mxu0 0.0
    %235 = vmatmul.mubr.f32.gmra.mrb[0].mxu0 %v80
    %v236 = vpop.f32.mrb[0].mxu0
    %v237 = vadd.f32 0.0, %v236
    %v238 = vpop.f32.mrb[0].mxu0
    %239 = vmatprep.mubr.f32.mxu0 0.0
    %240 = vmatmul.mubr.f32.gmra.mrb[0].mxu0 %v83
    %v241 = vpop.f32.mrb[0].mxu0
    %v242 = vadd.f32 0.0, %v241
    %v243 = vpop.f32.mrb[0].mxu0
    %244 = vdwg.mxu0
    %v245 = vadd.f32 %v164, %v237
    %v246 = vadd.f32 %v165, %v242
    %247 = vst [vmem:[#allocation3] sm:$0xff] %v245
    %248 = vst [vmem:[#allocation3 + $0x8] sm:$0xff] %v246
    // Predicated region
    $region38: #{tpu_custom_call.1} parent=1 // pred_check
      %p249 = pneg %p62
    $region39: #{tpu_custom_call.1} parent=1 // pred_check_branch
      %251 = sbr.rel (%p249) target = $region41
    $region40: #{tpu_custom_call.1} parent=1 // pred_region
      %v252 = vld [vmem:[#allocation2] sm:$0xff]
      %v253 = vld [vmem:[#allocation2 + $0x8] sm:$0xff]
      %v254 = vld [vmem:[%s3] sm:$0x1]
      %v256 = vlaneseq
      %v257 = vshrl.u32 %v256, 7
      %v258 = vsub.s32 0, %v257
      %v259 = vrot.slane %v254, %v258
      %v261 = vadd.f32 %v252, %v259
      %v262 = vadd.f32 %v253, %v259
      %v263 = vld [vmem:[#allocation3] sm:$0xff]
      %v264 = vld [vmem:[#allocation3 + $0x8] sm:$0xff]
      %v265 = vld [vmem:[%s4] sm:$0x1]
      %v267 = vlaneseq
      %v268 = vshrl.u32 %v267, 7
      %v269 = vsub.s32 0, %v268
      %v270 = vrot.slane %v265, %v269
      %v272 = vadd.f32 %v263, %v270
      %v273 = vadd.f32 %v264, %v270
      %v274 = vmul.f32 %v272, 0.5
      %v275 = vmul.f32 %v273, 0.5
      %v276 = vmul.f32 %v272, 0.70710677
      %v277 = vmul.f32 %v273, 0.70710677
      %vm278 = vcmp.ge.f32.partialorder %v276, 0.0
      %vm279 = vcmp.ge.f32.partialorder %v277, 0.0
      %v280 = vsel %vm278, 1.0, -1.0
      %v281 = vsel %vm279, 1.0, -1.0
      %v282 = vand.u32 2147483647, %v276
      %v283 = vand.u32 2147483647, %v277
      %v284 = vmul.f32 %v282, 0.3275911
      %v285 = vmul.f32 %v283, 0.3275911
      %v286 = vadd.f32 %v284, 1.0
      %v287 = vadd.f32 %v285, 1.0
      %v288 = vrcp.pop %v286
      %v289 = vmul.f32 1.0, %v288
      %v290 = vrcp.pop %v287
      %v291 = vmul.f32 1.0, %v290
      %v292 = vmul.f32 %v289, 1.0614054
      %v293 = vmul.f32 %v291, 1.0614054
      %v294 = vadd.f32 %v292, -1.4531521
      %v295 = vadd.f32 %v293, -1.4531521
      %v296 = vmul.f32 %v294, %v289
      %v297 = vmul.f32 %v295, %v291
      %v298 = vadd.f32 %v296, 1.4214138
      %v299 = vadd.f32 %v297, 1.4214138
      %v300 = vmul.f32 %v298, %v289
      %v301 = vmul.f32 %v299, %v291
      %v302 = vadd.f32 %v300, -0.28449672
      %v303 = vadd.f32 %v301, -0.28449672
      %v304 = vmul.f32 %v302, %v289
      %v305 = vmul.f32 %v303, %v291
      %v306 = vadd.f32 %v304, 0.2548296
      %v307 = vadd.f32 %v305, 0.2548296
      %v308 = vmul.f32 %v306, %v289
      %v309 = vmul.f32 %v307, %v291
      %v310 = vsub.f32 0.0, %v282
      %v311 = vsub.f32 0.0, %v283
      %v312 = vmul.f32 %v310, %v282
      %v313 = vmul.f32 %v311, %v283
      %v314 = vmul.f32 %v312, 1.442695
      %v315 = vpow.pop %v314
      %v316 = vmul.f32 %v313, 1.442695
      %v317 = vpow.pop %v316
      %v318 = vmul.f32 %v308, %v315
      %v319 = vmul.f32 %v309, %v317
      %v320 = vsub.f32 1.0, %v318
      %v321 = vsub.f32 1.0, %v319
      %v322 = vmul.f32 %v280, %v320
      %v323 = vmul.f32 %v281, %v321
      %v324 = vadd.f32 %v322, 1.0
      %v325 = vadd.f32 %v323, 1.0
      %v326 = vmul.f32 %v274, %v324
      %v327 = vmul.f32 %v275, %v325
      %v328 = vmul.f32 %v261, %v326
      %v329 = vmul.f32 %v262, %v327
      %330 = vst [vmem:[#allocation10] sm:$0xff] %v328
      %331 = vst [vmem:[#allocation10 + $0x8] sm:$0xff] %v329
    $region41: #{tpu_custom_call.1} parent=1 // pred_fallthru
      _
    // Predicated region
    $region42: #{tpu_custom_call.1} parent=1 // pred_check
      _
    $region43: #{tpu_custom_call.1} parent=1 // pred_check_branch
      %333 = sbr.rel (0) target = $region45
    $region44: #{tpu_custom_call.1} parent=1 // pred_region
      %s335 = ssub.s32 256, 256
      %336 = vsyncadd [#allocation6], %s335
      %s337 = sshll.u32 [#allocation10], 4
      %s338 = int_to_ptr.vmem [resolvable:$true] %s337
      %343 = dma.vmem_to_hbm [thread:$0]  %s338, 256, %s5, [#allocation6], 128, 128, 8
    $region45: #{tpu_custom_call.1} parent=1 // pred_fallthru
      _
    // Predicated region
    $region46: #{tpu_custom_call.1} parent=1 // pred_check
      _
    $region47: #{tpu_custom_call.1} parent=1 // pred_check_branch
      %345 = sbr.rel (0) target = $region49
    $region48: #{tpu_custom_call.1} parent=1 // pred_region
      %346 = dma.done [#allocation6], 256
    $region49: #{tpu_custom_call.1} parent=1 // pred_fallthru
      _
    %347 = vsyncpa [#allocation5], 1
    %348 = vsyncpa [#allocation8], 1
    %349 = vsyncpa [#allocation6], 1

</llo_original>
